<compile_context>
chip_gen: v5e
topology: v5e:2x2
jax: 0.10.0
libtpu: 0.0.40
codegen_flags: <defaults>
</compile_context>

<pallas_src>
import jax
import jax.numpy as jnp
from jax.experimental import pallas as pl
from jax.experimental.pallas import tpu as pltpu


def _round_up(x, m):
    return (x + m - 1) // m * m


def _fused_double_clf_kernel(x_ref, w1_ref, b1_ref, w2_ref, b2_ref, out_ref):
    """Fused forward for both classifier heads (one batch tile per grid step).

    All operands are pre-padded in the wrapper to whole (8, 128) vreg tiles:
      x  : (TB,     D_pad)
      w1 : (D_pad,  H2_pad)   # [w1_family | w1_name] column-concatenated
      b1 : (1,      H2_pad)   # f32
      w2 : (H2_pad, C_pad)    # block-diagonal [[w2f, 0], [0, w2n]]
      b2 : (1,      C_pad)    # f32
      out: (TB,     C_pad)    # [fam_logits | name_logits | zero pad]
    Two lane-dense MXU matmuls total (was 4 narrow ones); the single
    (TB, C_pad) output store is unmasked (last dim is a multiple of 128).
    """
    x = x_ref[...]
    h = jnp.dot(x, w1_ref[...], preferred_element_type=jnp.float32)
    h = jnp.maximum(h + b1_ref[...], 0.0)          # ReLU (f32)
    h = h.astype(w2_ref.dtype)                     # back to compute dtype for MXU
    logits = jnp.dot(h, w2_ref[...], preferred_element_type=jnp.float32)
    out_ref[...] = (logits + b2_ref[...]).astype(out_ref.dtype)


def pack_params(params, compute_dtype=jnp.bfloat16):
    """One-time packing of the two heads into fused, TPU-tile-padded weights."""
    D, H = params["w1f"].shape
    n_fam = params["w2f"].shape[1]
    n_lang = params["w2n"].shape[1]
    H2 = 2 * H
    C = n_fam + n_lang
    D_pad = _round_up(D, 128)
    H2_pad = _round_up(H2, 128)
    C_pad = _round_up(C, 128)

    # Fused first layer: columns [0:H] = family head, [H:2H] = name head.
    w1 = jnp.zeros((D_pad, H2_pad), compute_dtype)
    w1 = w1.at[:D, :H].set(params["w1f"].astype(compute_dtype))
    w1 = w1.at[:D, H:H2].set(params["w1n"].astype(compute_dtype))
    b1 = jnp.zeros((1, H2_pad), jnp.float32)
    b1 = b1.at[:, :H].set(params["b1f"].astype(jnp.float32))
    b1 = b1.at[:, H:H2].set(params["b1n"].astype(jnp.float32))

    # Fused second layer: exact block-diagonal (off-diagonal blocks are zero,
    # so the two heads stay independent).
    w2 = jnp.zeros((H2_pad, C_pad), compute_dtype)
    w2 = w2.at[:H, :n_fam].set(params["w2f"].astype(compute_dtype))
    w2 = w2.at[H:H2, n_fam:C].set(params["w2n"].astype(compute_dtype))
    b2 = jnp.zeros((1, C_pad), jnp.float32)
    b2 = b2.at[:, :n_fam].set(params["b2f"].astype(jnp.float32))
    b2 = b2.at[:, n_fam:C].set(params["b2n"].astype(jnp.float32))

    meta = dict(D=D, H=H, n_fam=n_fam, n_lang=n_lang,
                D_pad=D_pad, H2_pad=H2_pad, C_pad=C_pad)
    return dict(w1=w1, b1=b1, w2=w2, b2=b2), meta


def double_classifier_forward(x, packed, meta, *, batch_block=128):
    """Returns (language_family_logits, language_name_logits), both float32."""
    B, D = x.shape
    assert D == meta["D"]
    D_pad, H2_pad, C_pad = meta["D_pad"], meta["H2_pad"], meta["C_pad"]
    n_fam, n_lang = meta["n_fam"], meta["n_lang"]
    compute_dtype = packed["w1"].dtype

    # Batch tile: at least a full 8-sublane group, at most `batch_block` rows.
    tb = min(_round_up(B, 8), batch_block)
    B_pad = _round_up(B, tb)
    num_blocks = B_pad // tb

    # Pad x to whole (8,128) tiles; padded rows/cols are zero (harmless).
    x_pad = jnp.zeros((B_pad, D_pad), compute_dtype)
    x_pad = x_pad.at[:B, :D].set(x.astype(compute_dtype))

    out = pl.pallas_call(
        _fused_double_clf_kernel,
        out_shape=jax.ShapeDtypeStruct((B_pad, C_pad), jnp.float32),
        grid=(num_blocks,),
        in_specs=[
            pl.BlockSpec((tb, D_pad), lambda i: (i, 0)),        # x: batch-tiled
            pl.BlockSpec((D_pad, H2_pad), lambda i: (0, 0)),    # weights stay
            pl.BlockSpec((1, H2_pad), lambda i: (0, 0)),        # resident across
            pl.BlockSpec((H2_pad, C_pad), lambda i: (0, 0)),    # the batch grid
            pl.BlockSpec((1, C_pad), lambda i: (0, 0)),
        ],
        out_specs=pl.BlockSpec((tb, C_pad), lambda i: (i, 0)),
        compiler_params=pltpu.CompilerParams(
            dimension_semantics=("parallel",)),                 # v7x: 2 TCs
    )(x_pad, packed["w1"], packed["b1"], packed["w2"], packed["b2"])

    fam = out[:B, :n_fam]
    name = out[:B, n_fam:n_fam + n_lang]
    return fam, name


def init_params(key, emb_dim, hidden, n_lang_families, n_languages):
    ks = jax.random.split(key, 8)
    scale1 = 1.0 / jnp.sqrt(emb_dim)
    scale2 = 1.0 / jnp.sqrt(hidden)
    return {
        # language_family_clf
        "w1f": jax.random.normal(ks[0], (emb_dim, hidden), jnp.float32) * scale1,
        "b1f": jax.random.normal(ks[1], (1, hidden), jnp.float32) * 0.01,
        "w2f": jax.random.normal(ks[2], (hidden, n_lang_families), jnp.float32) * scale2,
        "b2f": jax.random.normal(ks[3], (1, n_lang_families), jnp.float32) * 0.01,
        # language_name_clf
        "w1n": jax.random.normal(ks[4], (emb_dim, hidden), jnp.float32) * scale1,
        "b1n": jax.random.normal(ks[5], (1, hidden), jnp.float32) * 0.01,
        "w2n": jax.random.normal(ks[6], (hidden, n_languages), jnp.float32) * scale2,
        "b2n": jax.random.normal(ks[7], (1, n_languages), jnp.float32) * 0.01,
    }


def reference_forward(x, p, compute_dtype=jnp.float32):
    """Pure-JAX reference, optionally mirroring the kernel's bf16 operand casts."""
    cd = compute_dtype
    xc = x.astype(cd)
    h_f = jnp.maximum(
        jnp.dot(xc, p["w1f"].astype(cd), preferred_element_type=jnp.float32)
        + p["b1f"], 0.0).astype(cd)
    fam = jnp.dot(h_f, p["w2f"].astype(cd),
                  preferred_element_type=jnp.float32) + p["b2f"]
    h_n = jnp.maximum(
        jnp.dot(xc, p["w1n"].astype(cd), preferred_element_type=jnp.float32)
        + p["b1n"], 0.0).astype(cd)
    name = jnp.dot(h_n, p["w2n"].astype(cd),
                   preferred_element_type=jnp.float32) + p["b2n"]
    return fam, name


if __name__ == "__main__":
    B = 4            # batch (BS_4 in experiment name)
    EMB = 32         # embedding dim (small stand-in for ECAPA embeddings)
    HID = 32         # hidden width of each classifier head
    N_FAM = 24       # n_lang_families
    N_LANG = 45      # n_languages

    key = jax.random.PRNGKey(0)
    kx, kp = jax.random.split(key)
    x = jax.random.normal(kx, (B, EMB), jnp.float32)
    params = init_params(kp, EMB, HID, N_FAM, N_LANG)

    # --- bf16 compute path (MXU-native dtype; f32 accumulation) ---
    packed_bf16, meta = pack_params(params, compute_dtype=jnp.bfloat16)
    fam_bf16, name_bf16 = double_classifier_forward(x, packed_bf16, meta)
    jax.block_until_ready((fam_bf16, name_bf16))
    fam_ref_bf16, name_ref_bf16 = reference_forward(x, params, jnp.bfloat16)
    assert fam_bf16.shape == (B, N_FAM)
    assert name_bf16.shape == (B, N_LANG)
    assert jnp.allclose(fam_bf16, fam_ref_bf16, atol=1e-3, rtol=1e-3)
    assert jnp.allclose(name_bf16, name_ref_bf16, atol=1e-3, rtol=1e-3)

    # --- f32 compute path (exact original-module semantics) ---
    packed_f32, meta_f32 = pack_params(params, compute_dtype=jnp.float32)
    fam_f32, name_f32 = double_classifier_forward(x, packed_f32, meta_f32)
    jax.block_until_ready((fam_f32, name_f32))
    fam_ref, name_ref = reference_forward(x, params, jnp.float32)
    assert jnp.allclose(fam_f32, fam_ref, atol=1e-4, rtol=1e-4)
    assert jnp.allclose(name_f32, name_ref, atol=1e-4, rtol=1e-4)

    print("KERNEL_OK")
</pallas_src>

<mosaic_0001>
module attributes {stable_mosaic.version = 11 : i64} {
  func.func @_fused_double_clf_kernel(%arg0: i32, %arg1: memref<8x128xbf16, #tpu.memory_space<vmem>>, %arg2: memref<128x128xbf16, #tpu.memory_space<vmem>>, %arg3: memref<1x128xf32, #tpu.memory_space<vmem>>, %arg4: memref<128x128xbf16, #tpu.memory_space<vmem>>, %arg5: memref<1x128xf32, #tpu.memory_space<vmem>>, %arg6: memref<8x128xf32, #tpu.memory_space<vmem>>) attributes {dimension_semantics = [#tpu.dimension_semantics<parallel>], iteration_bounds = array<i64: 1>, scalar_prefetch = 0 : i64, scratch_operands = 0 : i64, tpu.core_type = #tpu.core_type<tc>, window_params = [{transform_indices = @transform_0, window_bounds = array<i64: 8, 128>}, {pipeline_mode = #tpu.pipeline_mode<synchronous>, transform_indices = @transform_1, window_bounds = array<i64: 128, 128>}, {pipeline_mode = #tpu.pipeline_mode<synchronous>, transform_indices = @transform_2, window_bounds = array<i64: 1, 128>}, {pipeline_mode = #tpu.pipeline_mode<synchronous>, transform_indices = @transform_3, window_bounds = array<i64: 128, 128>}, {pipeline_mode = #tpu.pipeline_mode<synchronous>, transform_indices = @transform_4, window_bounds = array<i64: 1, 128>}, {transform_indices = @transform_5, window_bounds = array<i64: 8, 128>}]} {
    %c0 = arith.constant 0 : index
    %c0_0 = arith.constant 0 : index
    %0 = vector.load %arg1[%c0, %c0_0] : memref<8x128xbf16, #tpu.memory_space<vmem>>, vector<8x128xbf16>
    %c0_1 = arith.constant 0 : index
    %c0_2 = arith.constant 0 : index
    %1 = vector.load %arg2[%c0_1, %c0_2] : memref<128x128xbf16, #tpu.memory_space<vmem>>, vector<128x128xbf16>
    %cst = arith.constant dense<0.000000e+00> : vector<8x128xf32>
    %2 = tpu.matmul %0, %1, %cst {dimension_numbers = #tpu.dot_dimension_numbers<[1], [0], [0], [1], [0, 0, 1, 1], [], []>} : vector<8x128xbf16>, vector<128x128xbf16>, vector<8x128xf32> -> vector<8x128xf32>
    %c0_3 = arith.constant 0 : index
    %c0_4 = arith.constant 0 : index
    %3 = vector.load %arg3[%c0_3, %c0_4] : memref<1x128xf32, #tpu.memory_space<vmem>>, vector<1x128xf32>
    %4 = vector.broadcast %3 : vector<1x128xf32> to vector<8x128xf32>
    %5 = arith.addf %2, %4 : vector<8x128xf32>
    %cst_5 = arith.constant 0.000000e+00 : f32
    %6 = vector.broadcast %cst_5 : f32 to vector<8x128xf32>
    %7 = arith.maximumf %5, %6 : vector<8x128xf32>
    %8 = arith.truncf %7 : vector<8x128xf32> to vector<8x128xbf16>
    %c0_6 = arith.constant 0 : index
    %c0_7 = arith.constant 0 : index
    %9 = vector.load %arg4[%c0_6, %c0_7] : memref<128x128xbf16, #tpu.memory_space<vmem>>, vector<128x128xbf16>
    %cst_8 = arith.constant dense<0.000000e+00> : vector<8x128xf32>
    %10 = tpu.matmul %8, %9, %cst_8 {dimension_numbers = #tpu.dot_dimension_numbers<[1], [0], [0], [1], [0, 0, 1, 1], [], []>} : vector<8x128xbf16>, vector<128x128xbf16>, vector<8x128xf32> -> vector<8x128xf32>
    %c0_9 = arith.constant 0 : index
    %c0_10 = arith.constant 0 : index
    %11 = vector.load %arg5[%c0_9, %c0_10] : memref<1x128xf32, #tpu.memory_space<vmem>>, vector<1x128xf32>
    %12 = vector.broadcast %11 : vector<1x128xf32> to vector<8x128xf32>
    %13 = arith.addf %10, %12 : vector<8x128xf32>
    %c0_11 = arith.constant 0 : index
    %c0_12 = arith.constant 0 : index
    %14 = vector.load %arg6[%c0_11, %c0_12] : memref<8x128xf32, #tpu.memory_space<vmem>>, vector<8x128xf32>
    tpu.vector_store %arg6[%c0_11, %c0_12], %13 {strides = array<i32>} : memref<8x128xf32, #tpu.memory_space<vmem>>, vector<8x128xf32>,
    return
  }
  func.func @transform_0(%arg0: i32) -> (i32, i32) {
    %c0_i32 = arith.constant 0 : i32
    %c0_i32_0 = arith.constant 0 : i32
    return %arg0, %c0_i32 : i32, i32
  }
  func.func @transform_1(%arg0: i32) -> (i32, i32) {
    %c0_i32 = arith.constant 0 : i32
    %c0_i32_0 = arith.constant 0 : i32
    %c0_i32_1 = arith.constant 0 : i32
    return %c0_i32, %c0_i32_0 : i32, i32
  }
  func.func @transform_2(%arg0: i32) -> (i32, i32) {
    %c0_i32 = arith.constant 0 : i32
    %c0_i32_0 = arith.constant 0 : i32
    %c0_i32_1 = arith.constant 0 : i32
    return %c0_i32, %c0_i32_0 : i32, i32
  }
  func.func @transform_3(%arg0: i32) -> (i32, i32) {
    %c0_i32 = arith.constant 0 : i32
    %c0_i32_0 = arith.constant 0 : i32
    %c0_i32_1 = arith.constant 0 : i32
    return %c0_i32, %c0_i32_0 : i32, i32
  }
  func.func @transform_4(%arg0: i32) -> (i32, i32) {
    %c0_i32 = arith.constant 0 : i32
    %c0_i32_0 = arith.constant 0 : i32
    %c0_i32_1 = arith.constant 0 : i32
    return %c0_i32, %c0_i32_0 : i32, i32
  }
  func.func @transform_5(%arg0: i32) -> (i32, i32) {
    %c0_i32 = arith.constant 0 : i32
    %c0_i32_0 = arith.constant 0 : i32
    return %arg0, %c0_i32 : i32, i32
  }
}

</mosaic_0001>

<llo_original>
// kernel: tpu_custom_call.1
$region0: #{tpu_custom_call.1}
  #allocation0 [shape = 'u32[]', space=smem, size = 0x4, offset = 0x4, fixed_abs, tag = 'smem constant byte address 0x4 - core index']
  #allocation1 [shape = 'u32[72,128]{1,0:T(1,128)}', space=vmem, size = 0x9000, scoped, tag = 'internal scratch']
  %s0 = inlined_call_operand.hbm [shape: bf16[8,128], index: 0, kind: input, shape index: {}]
  %s1 = inlined_call_operand.hbm [shape: bf16[128,128], index: 1, kind: input, shape index: {}]
  %s2 = inlined_call_operand.vmem [shape: f32[1,128], index: 2, kind: input, shape index: {}]
  %s3 = inlined_call_operand.hbm [shape: bf16[128,128], index: 3, kind: input, shape index: {}]
  %s4 = inlined_call_operand.vmem [shape: f32[1,128], index: 4, kind: input, shape index: {}]
  %s5 = inlined_call_operand.hbm [shape: f32[8,128], index: 5, kind: output, shape index: {}]
  %s6 = sld [smem:[#allocation0]]
  $region42: #{tpu_custom_call.1} parent=0
    _
  %s8 = ssub.s32 1, %s6
  %s9 = scalar_select 0, %s8, %s6
  $region1: #{tpu_custom_call.1} parent=0
    #allocation2 [shape = 'u8[2048]{0}', space=vmem, size = 0x800, scoped, tag = 'input window, operand 0, single buffered']
    #allocation3 [shape = 's32[1]{0}', space=sflag, size = 0x4, scoped, tag = 'scoped memory for tpu_custom_call.1']
    #allocation4 [shape = 's32[1]{0}', space=sflag, size = 0x4, scoped, tag = 'scoped memory for tpu_custom_call.1']
    #allocation5 [shape = 'u8[32768]{0}', space=vmem, size = 0x8000, scoped, tag = 'input window, operand 1, single buffered']
    #allocation6 [shape = 's32[1]{0}', space=sflag, size = 0x4, scoped, tag = 'scoped memory for tpu_custom_call.1']
    #allocation7 [shape = 'u8[32768]{0}', space=vmem, size = 0x8000, scoped, tag = 'input window, operand 3, single buffered']
    #allocation8 [shape = 'u8[4096]{0}', space=vmem, size = 0x1000, scoped, tag = 'output window, operand 0, single buffered']
    %10 = vsyncpa [#allocation3], 0
    %11 = vsyncpa [#allocation6], 0
    %12 = vsyncpa [#allocation4], 0
    // Predicated region
    $region2: #{tpu_custom_call.1} parent=1 // pred_check
      _
    $region3: #{tpu_custom_call.1} parent=1 // pred_check_branch
      %14 = sbr.rel (0) target = $region5
    $region4: #{tpu_custom_call.1} parent=1 // pred_region
      %16 = vsyncadd [#allocation3], 0
      %s18 = sshll.u32 %s0, 4
      %s19 = int_to_ptr.hbm [resolvable:$true] %s18
      %s20 = sshll.u32 [#allocation2], 4
      %s21 = int_to_ptr.vmem [resolvable:$true] %s20
      %23 = dma.hbm_to_vmem [thread:$0]  %s19, 64, %s21, [#allocation3]
    $region5: #{tpu_custom_call.1} parent=1 // pred_fallthru
      _
    // Predicated region
    $region6: #{tpu_custom_call.1} parent=1 // pred_check
      _
    $region7: #{tpu_custom_call.1} parent=1 // pred_check_branch
      %25 = sbr.rel (0) target = $region9
    $region8: #{tpu_custom_call.1} parent=1 // pred_region
      %27 = vsyncadd [#allocation6], 0
      %s28 = sshll.u32 %s1, 4
      %s29 = int_to_ptr.hbm [resolvable:$true] %s28
      %s30 = sshll.u32 [#allocation5], 4
      %s31 = int_to_ptr.vmem [resolvable:$true] %s30
      %36 = dma.hbm_to_vmem [thread:$0]  %s29, 1024, %s31, [#allocation6], 64, 64, 4
    $region9: #{tpu_custom_call.1} parent=1 // pred_fallthru
      _
    // Predicated region
    $region10: #{tpu_custom_call.1} parent=1 // pred_check
      _
    $region11: #{tpu_custom_call.1} parent=1 // pred_check_branch
      %38 = sbr.rel (0) target = $region13
    $region12: #{tpu_custom_call.1} parent=1 // pred_region
      _
    $region13: #{tpu_custom_call.1} parent=1 // pred_fallthru
      _
    // Predicated region
    $region14: #{tpu_custom_call.1} parent=1 // pred_check
      _
    $region15: #{tpu_custom_call.1} parent=1 // pred_check_branch
      %40 = sbr.rel (0) target = $region17
    $region16: #{tpu_custom_call.1} parent=1 // pred_region
      %42 = vsyncadd [#allocation6], 0
      %s43 = sshll.u32 %s3, 4
      %s44 = int_to_ptr.hbm [resolvable:$true] %s43
      %s45 = sshll.u32 [#allocation7], 4
      %s46 = int_to_ptr.vmem [resolvable:$true] %s45
      %51 = dma.hbm_to_vmem [thread:$0]  %s44, 1024, %s46, [#allocation6], 64, 64, 4
    $region17: #{tpu_custom_call.1} parent=1 // pred_fallthru
      _
    // Predicated region
    $region18: #{tpu_custom_call.1} parent=1 // pred_check
      _
    $region19: #{tpu_custom_call.1} parent=1 // pred_check_branch
      %53 = sbr.rel (0) target = $region21
    $region20: #{tpu_custom_call.1} parent=1 // pred_region
      _
    $region21: #{tpu_custom_call.1} parent=1 // pred_fallthru
      _
    // Predicated region
    $region22: #{tpu_custom_call.1} parent=1 // pred_check
      _
    $region23: #{tpu_custom_call.1} parent=1 // pred_check_branch
      %55 = sbr.rel (0) target = $region25
    $region24: #{tpu_custom_call.1} parent=1 // pred_region
      %57 = dma.done [#allocation3], 64
    $region25: #{tpu_custom_call.1} parent=1 // pred_fallthru
      _
    // Predicated region
    $region26: #{tpu_custom_call.1} parent=1 // pred_check
      _
    $region27: #{tpu_custom_call.1} parent=1 // pred_check_branch
      %59 = sbr.rel (0) target = $region29
    $region28: #{tpu_custom_call.1} parent=1 // pred_region
      %61 = dma.done [#allocation6], 1024
    $region29: #{tpu_custom_call.1} parent=1 // pred_fallthru
      _
    // Predicated region
    $region30: #{tpu_custom_call.1} parent=1 // pred_check
      _
    $region31: #{tpu_custom_call.1} parent=1 // pred_check_branch
      %63 = sbr.rel (0) target = $region33
    $region32: #{tpu_custom_call.1} parent=1 // pred_region
      %65 = dma.done [#allocation6], 1024
    $region33: #{tpu_custom_call.1} parent=1 // pred_fallthru
      _
    %v66 = vld [vmem:[#allocation2] sm:$0xf]
    %v67 = vld [vmem:[#allocation5] sm:$0xf]
    %v68 = vld [vmem:[#allocation5 + $0x4] sm:$0xf]
    %v69 = vld [vmem:[#allocation5 + $0x8] sm:$0xf]
    %v70 = vld [vmem:[#allocation5 + $0xc] sm:$0xf]
    %v71 = vld [vmem:[#allocation5 + $0x10] sm:$0xf]
    %v72 = vld [vmem:[#allocation5 + $0x14] sm:$0xf]
    %v73 = vld [vmem:[#allocation5 + $0x18] sm:$0xf]
    %v74 = vld [vmem:[#allocation5 + $0x1c] sm:$0xf]
    %v75 = vld [vmem:[#allocation5 + $0x20] sm:$0xf]
    %v76 = vld [vmem:[#allocation5 + $0x24] sm:$0xf]
    %v77 = vld [vmem:[#allocation5 + $0x28] sm:$0xf]
    %v78 = vld [vmem:[#allocation5 + $0x2c] sm:$0xf]
    %v79 = vld [vmem:[#allocation5 + $0x30] sm:$0xf]
    %v80 = vld [vmem:[#allocation5 + $0x34] sm:$0xf]
    %v81 = vld [vmem:[#allocation5 + $0x38] sm:$0xf]
    %v82 = vld [vmem:[#allocation5 + $0x3c] sm:$0xf]
    %v83 = vld [vmem:[%s2] sm:$0x1]
    %v85 = vperm.slane %v83, 0
    %v103 = vunpack.c.l.b16 %v67
    %v104 = vunpack.c.l.b16 %v68
    %v105 = vunpack.c.l.b16 %v69
    %v106 = vunpack.c.l.b16 %v70
    %v107 = vunpack.c.l.b16 %v71
    %v108 = vunpack.c.l.b16 %v72
    %v109 = vunpack.c.l.b16 %v73
    %v110 = vunpack.c.l.b16 %v74
    %v111 = vunpack.c.l.b16 %v75
    %v112 = vunpack.c.l.b16 %v76
    %v113 = vunpack.c.l.b16 %v77
    %v114 = vunpack.c.l.b16 %v78
    %v115 = vunpack.c.l.b16 %v79
    %v116 = vunpack.c.l.b16 %v80
    %v117 = vunpack.c.l.b16 %v81
    %v118 = vunpack.c.l.b16 %v82
    %v119 = vpack.c.b16 %v104, %v103
    %v120 = vpack.c.b16 %v106, %v105
    %v121 = vpack.c.b16 %v108, %v107
    %v122 = vpack.c.b16 %v110, %v109
    %v123 = vpack.c.b16 %v112, %v111
    %v124 = vpack.c.b16 %v114, %v113
    %v125 = vpack.c.b16 %v116, %v115
    %v126 = vpack.c.b16 %v118, %v117
    %135 = vmatpush.bf16.msra.mxu0 %v126
    %136 = vmatpush.bf16.msra.mxu0 %v125
    %137 = vmatpush.bf16.msra.mxu0 %v124
    %138 = vmatpush.bf16.msra.mxu0 %v123
    %139 = vmatpush.bf16.msra.mxu0 %v122
    %140 = vmatpush.bf16.msra.mxu0 %v121
    %141 = vmatpush.bf16.msra.mxu0 %v120
    %142 = vmatpush.bf16.msra.mxu0 %v119
    %143 = vmatmul.bf16.gmra.mxu0 %v66
    %v144 = vpop.f32.mrf.mxu0
    %v145 = vadd.f32 %v85, %v144
    %v146 = vpop.f32.mrf.mxu0
    %147 = vdwg.mxu0
    %v148 = vmax.f32 %v145, 0.0
    %v149 = vpack.c.bf16 %v148, %v148
    %v150 = vld [vmem:[#allocation7] sm:$0xf]
    %v151 = vld [vmem:[#allocation7 + $0x4] sm:$0xf]
    %v152 = vld [vmem:[#allocation7 + $0x8] sm:$0xf]
    %v153 = vld [vmem:[#allocation7 + $0xc] sm:$0xf]
    %v154 = vld [vmem:[#allocation7 + $0x10] sm:$0xf]
    %v155 = vld [vmem:[#allocation7 + $0x14] sm:$0xf]
    %v156 = vld [vmem:[#allocation7 + $0x18] sm:$0xf]
    %v157 = vld [vmem:[#allocation7 + $0x1c] sm:$0xf]
    %v158 = vld [vmem:[#allocation7 + $0x20] sm:$0xf]
    %v159 = vld [vmem:[#allocation7 + $0x24] sm:$0xf]
    %v160 = vld [vmem:[#allocation7 + $0x28] sm:$0xf]
    %v161 = vld [vmem:[#allocation7 + $0x2c] sm:$0xf]
    %v162 = vld [vmem:[#allocation7 + $0x30] sm:$0xf]
    %v163 = vld [vmem:[#allocation7 + $0x34] sm:$0xf]
    %v164 = vld [vmem:[#allocation7 + $0x38] sm:$0xf]
    %v165 = vld [vmem:[#allocation7 + $0x3c] sm:$0xf]
    %v166 = vld [vmem:[%s4] sm:$0x1]
    %v168 = vperm.slane %v166, 0
    %v186 = vunpack.c.l.b16 %v150
    %v187 = vunpack.c.l.b16 %v151
    %v188 = vunpack.c.l.b16 %v152
    %v189 = vunpack.c.l.b16 %v153
    %v190 = vunpack.c.l.b16 %v154
    %v191 = vunpack.c.l.b16 %v155
    %v192 = vunpack.c.l.b16 %v156
    %v193 = vunpack.c.l.b16 %v157
    %v194 = vunpack.c.l.b16 %v158
    %v195 = vunpack.c.l.b16 %v159
    %v196 = vunpack.c.l.b16 %v160
    %v197 = vunpack.c.l.b16 %v161
    %v198 = vunpack.c.l.b16 %v162
    %v199 = vunpack.c.l.b16 %v163
    %v200 = vunpack.c.l.b16 %v164
    %v201 = vunpack.c.l.b16 %v165
    %v202 = vpack.c.b16 %v187, %v186
    %v203 = vpack.c.b16 %v189, %v188
    %v204 = vpack.c.b16 %v191, %v190
    %v205 = vpack.c.b16 %v193, %v192
    %v206 = vpack.c.b16 %v195, %v194
    %v207 = vpack.c.b16 %v197, %v196
    %v208 = vpack.c.b16 %v199, %v198
    %v209 = vpack.c.b16 %v201, %v200
    %218 = vmatpush.bf16.msra.mxu0 %v209
    %219 = vmatpush.bf16.msra.mxu0 %v208
    %220 = vmatpush.bf16.msra.mxu0 %v207
    %221 = vmatpush.bf16.msra.mxu0 %v206
    %222 = vmatpush.bf16.msra.mxu0 %v205
    %223 = vmatpush.bf16.msra.mxu0 %v204
    %224 = vmatpush.bf16.msra.mxu0 %v203
    %225 = vmatpush.bf16.msra.mxu0 %v202
    %226 = vmatmul.bf16.gmra.mxu0 %v149
    %v227 = vpop.f32.mrf.mxu0
    %v228 = vadd.f32 %v168, %v227
    %v229 = vpop.f32.mrf.mxu0
    %230 = vdwg.mxu0
    %231 = vst [vmem:[#allocation8] sm:$0xff] %v228
    // Predicated region
    $region34: #{tpu_custom_call.1} parent=1 // pred_check
      _
    $region35: #{tpu_custom_call.1} parent=1 // pred_check_branch
      %233 = sbr.rel (0) target = $region37
    $region36: #{tpu_custom_call.1} parent=1 // pred_region
      %235 = vsyncadd [#allocation4], 0
      %s237 = sshll.u32 [#allocation8], 4
      %s238 = int_to_ptr.vmem [resolvable:$true] %s237
      %s239 = sshll.u32 %s5, 4
      %s240 = int_to_ptr.hbm [resolvable:$true] %s239
      %242 = dma.vmem_to_hbm [thread:$0]  %s238, 128, %s240, [#allocation4]
    $region37: #{tpu_custom_call.1} parent=1 // pred_fallthru
      _
    // Predicated region
    $region38: #{tpu_custom_call.1} parent=1 // pred_check
      _
    $region39: #{tpu_custom_call.1} parent=1 // pred_check_branch
      %244 = sbr.rel (0) target = $region41
    $region40: #{tpu_custom_call.1} parent=1 // pred_region
      %246 = dma.done [#allocation4], 128
    $region41: #{tpu_custom_call.1} parent=1 // pred_fallthru
      _
    %247 = vsyncpa [#allocation3], 1
    %248 = vsyncpa [#allocation6], 1
    %249 = vsyncpa [#allocation4], 1

</llo_original>
